<compile_context>
chip_gen: v7x
topology: tpu7x:2x2x1
jax: 0.10.0
libtpu: 0.0.40
codegen_flags: <defaults>
</compile_context>

<pallas_src>
import math

import jax
import jax.numpy as jnp
from jax.experimental import pallas as pl
from jax.experimental.pallas import tpu as pltpu

_MIB = 1024 * 1024


# ------------------------------ Pallas kernels ------------------------------ #

def _ffn_resident_kernel(x_ref, w1_ref, b1_ref, w2_ref, b2_ref, o_ref):
    """Whole FFN for one row tile; W1/W2/b1/b2 are VMEM-resident.

    Grid = (row_tiles,).  Weight/bias BlockSpecs use a constant block index, so
    they are DMA'd from HBM once and reused for every row tile.
    """
    x = x_ref[...].astype(w1_ref.dtype)                      # in-kernel bf16 cast
    h = jnp.dot(x, w1_ref[...], preferred_element_type=jnp.float32)
    h = jnp.maximum(h + b1_ref[...], 0.0)                    # bias + ReLU in f32
    y = jnp.dot(h.astype(w2_ref.dtype), w2_ref[...],
                preferred_element_type=jnp.float32)
    o_ref[...] = (y + b2_ref[...]).astype(o_ref.dtype)


def _ffn_streaming_kernel(x_ref, w1_ref, b1_ref, w2_ref, b2_ref, o_ref, acc_ref):
    """Fallback when W1/W2 do not fit in VMEM.

    Grid = (row_tiles, d_ff_tiles); d_ff is the pipelined reduction axis, the
    x/out blocks and the f32 accumulator are resident across it.
    """
    j = pl.program_id(1)

    @pl.when(j == 0)
    def _init():
        acc_ref[...] = jnp.zeros_like(acc_ref)

    x = x_ref[...].astype(w1_ref.dtype)
    h = jnp.dot(x, w1_ref[...], preferred_element_type=jnp.float32)
    h = jnp.maximum(h + b1_ref[...], 0.0)
    acc_ref[...] += jnp.dot(h.astype(w2_ref.dtype), w2_ref[...],
                            preferred_element_type=jnp.float32)

    @pl.when(j == pl.num_programs(1) - 1)
    def _finalize():
        o_ref[...] = (acc_ref[...] + b2_ref[...]).astype(o_ref.dtype)


# ------------------------------ sizing helpers ------------------------------ #

def _round_up(n, mult):
    return ((n + mult - 1) // mult) * mult


def _hw_params():
    """Generation-aware (tm_target, vmem_limit_bytes) with a safe fallback."""
    try:
        cap = int(pltpu.get_tpu_info().vmem_capacity_bytes)
    except Exception:
        cap = 64 * _MIB                 # assume the smallest per-TC VMEM (v7x)
    vmem_limit = int(cap * 0.75)        # 128 MiB -> 96 MiB, 64 MiB -> 48 MiB
    tm_target = 1024 if cap > 64 * _MIB else 512
    return tm_target, vmem_limit


def _pick_tm(m, target):
    """Row tile: <= target, 256-aligned when possible (full MXU), else a
    multiple of 16; >= 2 row tiles once m is large enough so the 'parallel'
    axis feeds both v7x TensorCores."""
    target = max(16, (target // 16) * 16)
    if m >= 512:
        target = min(target, _round_up(pl.cdiv(m, 2), 16))
    if m <= target:
        return _round_up(m, 8)          # single tile (rows get zero-padded)
    if target >= 256:
        return (target // 256) * 256
    return (target // 16) * 16


def _tf_candidates(d_ff):
    """Descending 128-multiples that evenly tile d_ff rounded up to 128."""
    n = pl.cdiv(d_ff, 128)
    return [k * 128 for k in range(n, 0, -1) if n % k == 0]


def _estimate_vmem_bytes(tm, tf, d_model, w_bytes, x_bytes, out_bytes, streaming):
    """Rough upper bound on per-step VMEM use (BlockSpec double-buffers every
    operand, even constant-index ones)."""
    weights = 2 * (2 * d_model * tf) * w_bytes                # W1 + W2 slices, x2 bufs
    biases = 2 * 2 * (tf + d_model) * 4
    xio = 2 * tm * d_model * (x_bytes + out_bytes)            # x + out tiles, x2 bufs
    interm = tm * tf * (4 + w_bytes) + tm * d_model * (w_bytes + 4)
    acc = tm * d_model * 4 if streaming else 0
    return weights + biases + xio + interm + acc


def _choose_tiling(m, d_model, d_ff, w_bytes, x_bytes, out_bytes,
                   tm_target, vmem_limit):
    budget = int(vmem_limit * 0.9)
    tm = _pick_tm(m, tm_target)
    tf_cands = _tf_candidates(d_ff)
    while True:
        # Preferred: W1/W2 fully VMEM-resident (tf == d_ff), 1-D grid over rows.
        if _estimate_vmem_bytes(tm, d_ff, d_model, w_bytes, x_bytes, out_bytes,
                                streaming=False) <= budget:
            return tm, d_ff
        # Otherwise stream the weights over a d_ff reduction axis.
        for tf in tf_cands:
            if tf >= d_ff:
                continue
            if _estimate_vmem_bytes(tm, tf, d_model, w_bytes, x_bytes, out_bytes,
                                    streaming=True) <= budget:
                return tm, tf
        if tm <= 16:
            return tm, 128              # last resort
        tm = max(16, ((tm // 2) // 16) * 16)


# --------------------------------- wrapper ---------------------------------- #

def position_wise_ffn(x, w1, b1, w2, b2, *, compute_dtype=jnp.bfloat16,
                      tm_target=None, tf_override=None):
    """y = relu(x @ w1 + b1) @ w2 + b2, fused into a single tiled Pallas call."""
    orig_shape = x.shape
    d_model = orig_shape[-1]
    d_ff = w1.shape[1]
    m = math.prod(orig_shape[:-1])

    hw_tm_target, vmem_limit = _hw_params()
    if tm_target is None:
        tm_target = hw_tm_target

    w_bytes = jnp.dtype(compute_dtype).itemsize
    x_bytes = jnp.dtype(x.dtype).itemsize
    out_bytes = x_bytes

    if tf_override is not None:
        tm = _pick_tm(m, tm_target)
        tf = min(int(tf_override), d_ff)
    else:
        tm, tf = _choose_tiling(m, d_model, d_ff, w_bytes, x_bytes, out_bytes,
                                tm_target, vmem_limit)
    resident = tf >= d_ff

    # x stays in its original dtype; the bf16 cast happens inside the kernel.
    x2 = x.reshape(m, d_model)
    m_pad = _round_up(m, tm)
    if m_pad != m:
        x2 = jnp.pad(x2, ((0, m_pad - m), (0, 0)))

    w1c = w1.astype(compute_dtype)
    w2c = w2.astype(compute_dtype)
    b1r = b1.reshape(1, d_ff).astype(jnp.float32)
    b2r = b2.reshape(1, d_model).astype(jnp.float32)

    if resident:
        grid = (m_pad // tm,)
        out = pl.pallas_call(
            _ffn_resident_kernel,
            out_shape=jax.ShapeDtypeStruct((m_pad, d_model), x.dtype),
            grid_spec=pltpu.PrefetchScalarGridSpec(
                num_scalar_prefetch=0,
                grid=grid,
                in_specs=[
                    pl.BlockSpec((tm, d_model), lambda i: (i, 0)),      # x rows
                    pl.BlockSpec((d_model, d_ff), lambda i: (0, 0)),    # W1 resident
                    pl.BlockSpec((1, d_ff), lambda i: (0, 0)),          # b1 resident
                    pl.BlockSpec((d_ff, d_model), lambda i: (0, 0)),    # W2 resident
                    pl.BlockSpec((1, d_model), lambda i: (0, 0)),       # b2 resident
                ],
                out_specs=pl.BlockSpec((tm, d_model), lambda i: (i, 0)),
            ),
            compiler_params=pltpu.CompilerParams(
                dimension_semantics=("parallel",),
                vmem_limit_bytes=vmem_limit,
            ),
        )(x2, w1c, b1r, w2c, b2r)
    else:
        d_ff_pad = _round_up(d_ff, tf)
        if d_ff_pad != d_ff:
            # Zero padding of the hidden dim contributes exactly 0 to the output.
            w1c = jnp.pad(w1c, ((0, 0), (0, d_ff_pad - d_ff)))
            b1r = jnp.pad(b1r, ((0, 0), (0, d_ff_pad - d_ff)))
            w2c = jnp.pad(w2c, ((0, d_ff_pad - d_ff), (0, 0)))
        grid = (m_pad // tm, d_ff_pad // tf)
        out = pl.pallas_call(
            _ffn_streaming_kernel,
            out_shape=jax.ShapeDtypeStruct((m_pad, d_model), x.dtype),
            grid_spec=pltpu.PrefetchScalarGridSpec(
                num_scalar_prefetch=0,
                grid=grid,
                in_specs=[
                    pl.BlockSpec((tm, d_model), lambda i, j: (i, 0)),   # x rows
                    # NOTE: add pipeline_mode=pl.Buffered(3) on the two weight
                    # specs only if profiling shows exposed weight DMA here.
                    pl.BlockSpec((d_model, tf), lambda i, j: (0, j)),   # W1 cols
                    pl.BlockSpec((1, tf),       lambda i, j: (0, j)),   # b1 slice
                    pl.BlockSpec((tf, d_model), lambda i, j: (j, 0)),   # W2 rows
                    pl.BlockSpec((1, d_model),  lambda i, j: (0, 0)),   # b2
                ],
                out_specs=pl.BlockSpec((tm, d_model), lambda i, j: (i, 0)),
                scratch_shapes=[pltpu.VMEM((tm, d_model), jnp.float32)],
            ),
            compiler_params=pltpu.CompilerParams(
                dimension_semantics=("parallel", "arbitrary"),
                vmem_limit_bytes=vmem_limit,
            ),
        )(x2, w1c, b1r, w2c, b2r)

    if m_pad != m:
        out = out[:m]
    return out.reshape(orig_shape)


# ------------------------------ pure-JAX refs -------------------------------- #

def reference_forward_f32(x, w1, b1, w2, b2):
    """Exact f32 PyTorch semantics (eval-mode dropout == identity)."""
    h = jnp.maximum(jnp.dot(x, w1) + b1, 0.0)
    return jnp.dot(h, w2) + b2


def reference_forward_bf16(x, w1, b1, w2, b2):
    """Same numerics as the kernel: bf16 MXU operands, f32 accumulate/bias/relu."""
    cd = jnp.bfloat16
    h = jnp.dot(x.astype(cd), w1.astype(cd), preferred_element_type=jnp.float32)
    h = jnp.maximum(h + b1.astype(jnp.float32), 0.0)
    y = jnp.dot(h.astype(cd), w2.astype(cd), preferred_element_type=jnp.float32)
    return y + b2.astype(jnp.float32)


# ----------------------------------- main ------------------------------------ #

def _init_params(key, d_model, d_ff):
    k1, k2 = jax.random.split(key)
    s = 0.02
    return {
        "w1": s * jax.random.normal(k1, (d_model, d_ff), jnp.float32),
        "b1": jnp.zeros((d_ff,), jnp.float32),
        "w2": s * jax.random.normal(k2, (d_ff, d_model), jnp.float32),
        "b2": jnp.zeros((d_model,), jnp.float32),
    }


def _check(x, p, **kwargs):
    out = position_wise_ffn(x, p["w1"], p["b1"], p["w2"], p["b2"], **kwargs)
    out = jax.block_until_ready(out)
    assert out.shape == x.shape and out.dtype == x.dtype

    ref_bf16 = reference_forward_bf16(x, p["w1"], p["b1"], p["w2"], p["b2"])
    ref_f32 = reference_forward_f32(x, p["w1"], p["b1"], p["w2"], p["b2"])

    err_bf16 = float(jnp.max(jnp.abs(out - ref_bf16)))
    err_f32 = float(jnp.max(jnp.abs(out - ref_f32)))
    # Tight: identical numerics modulo f32 accumulation order of the d_ff chunks.
    assert err_bf16 < 5e-4, f"mismatch vs bf16-matched reference: {err_bf16}"
    # Loose: bf16 operand quantization only.
    assert err_f32 < 3e-2, f"mismatch vs f32 reference: {err_f32}"
    return out


if __name__ == "__main__":
    key = jax.random.PRNGKey(0)
    kx1, kp1, kx2, kp2, kx3, kp3 = jax.random.split(key, 6)

    # Config 1: small shapes consistent with the module (batch=2, seq=8,
    # d_model=32, d_ff=64) -> weight-resident path, 1-D grid, single row tile.
    x1 = jax.random.normal(kx1, (2, 8, 32), jnp.float32)
    p1 = _init_params(kp1, 32, 64)
    _check(x1, p1)

    # Config 2: force the streaming fallback with a (2 row tiles) x (2 d_ff
    # tiles) grid to exercise accumulator init/finalize + pipelined reduction.
    x2 = jax.random.normal(kx2, (4, 16, 32), jnp.float32)
    p2 = _init_params(kp2, 32, 256)
    _check(x2, p2, tm_target=32, tf_override=128)

    # Config 3: row count not a multiple of 8 -> exercises the row-padding path.
    x3 = jax.random.normal(kx3, (3, 10, 32), jnp.float32)
    p3 = _init_params(kp3, 32, 64)
    _check(x3, p3)

    print("KERNEL_OK")
</pallas_src>

<mosaic_0001>
module attributes {stable_mosaic.version = 11 : i64} {
  func.func @_ffn_resident_kernel(%arg0: i32, %arg1: memref<16x32xf32, #tpu.memory_space<vmem>>, %arg2: memref<32x64xbf16, #tpu.memory_space<vmem>>, %arg3: memref<1x64xf32, #tpu.memory_space<vmem>>, %arg4: memref<64x32xbf16, #tpu.memory_space<vmem>>, %arg5: memref<1x32xf32, #tpu.memory_space<vmem>>, %arg6: memref<16x32xf32, #tpu.memory_space<vmem>>) attributes {dimension_semantics = [#tpu.dimension_semantics<parallel>], iteration_bounds = array<i64: 1>, scalar_prefetch = 0 : i64, scratch_operands = 0 : i64, tpu.core_type = #tpu.core_type<tc>, window_params = [{transform_indices = @transform_0, window_bounds = array<i64: 16, 32>}, {pipeline_mode = #tpu.pipeline_mode<synchronous>, transform_indices = @transform_1, window_bounds = array<i64: 32, 64>}, {pipeline_mode = #tpu.pipeline_mode<synchronous>, transform_indices = @transform_2, window_bounds = array<i64: 1, 64>}, {pipeline_mode = #tpu.pipeline_mode<synchronous>, transform_indices = @transform_3, window_bounds = array<i64: 64, 32>}, {pipeline_mode = #tpu.pipeline_mode<synchronous>, transform_indices = @transform_4, window_bounds = array<i64: 1, 32>}, {transform_indices = @transform_5, window_bounds = array<i64: 16, 32>}]} {
    %c0 = arith.constant 0 : index
    %c0_0 = arith.constant 0 : index
    %0 = vector.load %arg1[%c0, %c0_0] : memref<16x32xf32, #tpu.memory_space<vmem>>, vector<16x32xf32>
    %1 = arith.truncf %0 : vector<16x32xf32> to vector<16x32xbf16>
    %c0_1 = arith.constant 0 : index
    %c0_2 = arith.constant 0 : index
    %2 = vector.load %arg2[%c0_1, %c0_2] : memref<32x64xbf16, #tpu.memory_space<vmem>>, vector<32x64xbf16>
    %cst = arith.constant dense<0.000000e+00> : vector<16x64xf32>
    %3 = tpu.matmul %1, %2, %cst {dimension_numbers = #tpu.dot_dimension_numbers<[1], [0], [0], [1], [0, 0, 1, 1], [], []>} : vector<16x32xbf16>, vector<32x64xbf16>, vector<16x64xf32> -> vector<16x64xf32>
    %c0_3 = arith.constant 0 : index
    %c0_4 = arith.constant 0 : index
    %4 = vector.load %arg3[%c0_3, %c0_4] : memref<1x64xf32, #tpu.memory_space<vmem>>, vector<1x64xf32>
    %5 = vector.broadcast %4 : vector<1x64xf32> to vector<16x64xf32>
    %6 = arith.addf %3, %5 : vector<16x64xf32>
    %cst_5 = arith.constant 0.000000e+00 : f32
    %7 = vector.broadcast %cst_5 : f32 to vector<16x64xf32>
    %8 = arith.maximumf %6, %7 : vector<16x64xf32>
    %9 = arith.truncf %8 : vector<16x64xf32> to vector<16x64xbf16>
    %c0_6 = arith.constant 0 : index
    %c0_7 = arith.constant 0 : index
    %10 = vector.load %arg4[%c0_6, %c0_7] : memref<64x32xbf16, #tpu.memory_space<vmem>>, vector<64x32xbf16>
    %cst_8 = arith.constant dense<0.000000e+00> : vector<16x32xf32>
    %11 = tpu.matmul %9, %10, %cst_8 {dimension_numbers = #tpu.dot_dimension_numbers<[1], [0], [0], [1], [0, 0, 1, 1], [], []>} : vector<16x64xbf16>, vector<64x32xbf16>, vector<16x32xf32> -> vector<16x32xf32>
    %c0_9 = arith.constant 0 : index
    %c0_10 = arith.constant 0 : index
    %12 = vector.load %arg5[%c0_9, %c0_10] : memref<1x32xf32, #tpu.memory_space<vmem>>, vector<1x32xf32>
    %13 = vector.broadcast %12 : vector<1x32xf32> to vector<16x32xf32>
    %14 = arith.addf %11, %13 : vector<16x32xf32>
    %c0_11 = arith.constant 0 : index
    %c0_12 = arith.constant 0 : index
    %15 = vector.load %arg6[%c0_11, %c0_12] : memref<16x32xf32, #tpu.memory_space<vmem>>, vector<16x32xf32>
    tpu.vector_store %arg6[%c0_11, %c0_12], %14 {strides = array<i32>} : memref<16x32xf32, #tpu.memory_space<vmem>>, vector<16x32xf32>,
    return
  }
  func.func @transform_0(%arg0: i32) -> (i32, i32) {
    %c0_i32 = arith.constant 0 : i32
    %c0_i32_0 = arith.constant 0 : i32
    return %arg0, %c0_i32 : i32, i32
  }
  func.func @transform_1(%arg0: i32) -> (i32, i32) {
    %c0_i32 = arith.constant 0 : i32
    %c0_i32_0 = arith.constant 0 : i32
    %c0_i32_1 = arith.constant 0 : i32
    return %c0_i32, %c0_i32_0 : i32, i32
  }
  func.func @transform_2(%arg0: i32) -> (i32, i32) {
    %c0_i32 = arith.constant 0 : i32
    %c0_i32_0 = arith.constant 0 : i32
    %c0_i32_1 = arith.constant 0 : i32
    return %c0_i32, %c0_i32_0 : i32, i32
  }
  func.func @transform_3(%arg0: i32) -> (i32, i32) {
    %c0_i32 = arith.constant 0 : i32
    %c0_i32_0 = arith.constant 0 : i32
    %c0_i32_1 = arith.constant 0 : i32
    return %c0_i32, %c0_i32_0 : i32, i32
  }
  func.func @transform_4(%arg0: i32) -> (i32, i32) {
    %c0_i32 = arith.constant 0 : i32
    %c0_i32_0 = arith.constant 0 : i32
    %c0_i32_1 = arith.constant 0 : i32
    return %c0_i32, %c0_i32_0 : i32, i32
  }
  func.func @transform_5(%arg0: i32) -> (i32, i32) {
    %c0_i32 = arith.constant 0 : i32
    %c0_i32_0 = arith.constant 0 : i32
    return %arg0, %c0_i32 : i32, i32
  }
}

</mosaic_0001>

<llo_original>
// kernel: tpu_custom_call.1
$region0: #{tpu_custom_call.1}
  #allocation0 [shape = 'u32[]', space=smem, size = 0x4, offset = 0x4, fixed_abs, tag = 'smem constant byte address 0x4 - core index']
  #allocation1 [shape = 'u32[144,128]{1,0:T(1,128)}', space=vmem, size = 0x12000, scoped, tag = 'internal scratch']
  %s0 = inlined_call_operand.vmem [shape: f32[16,32], index: 0, kind: input, shape index: {}]
  %s1 = inlined_call_operand.vmem [shape: bf16[32,64], index: 1, kind: input, shape index: {}]
  %s2 = inlined_call_operand.vmem [shape: f32[1,64], index: 2, kind: input, shape index: {}]
  %s3 = inlined_call_operand.vmem [shape: bf16[64,32], index: 3, kind: input, shape index: {}]
  %s4 = inlined_call_operand.vmem [shape: f32[1,32], index: 4, kind: input, shape index: {}]
  %s5 = inlined_call_operand.hbm [shape: f32[16,32], index: 5, kind: output, shape index: {}]
  %s6 = sld [smem:[#allocation0]]
  $region30: #{tpu_custom_call.1} parent=0
    _
  %s8 = ssub.s32 1, %s6
  %s9 = scalar_select 0, %s8, %s6
  $region1: #{tpu_custom_call.1} parent=0
    #allocation2 [shape = 'u8[8192]{0}', space=vmem, size = 0x2000, scoped, tag = 'output window, operand 0, single buffered']
    #allocation3 [shape = 's32[1]{0}', space=sflag, size = 0x4, scoped, tag = 'scoped memory for tpu_custom_call.1']
    %10 = vsyncpa [#allocation3], 0
    // Predicated region
    $region2: #{tpu_custom_call.1} parent=1 // pred_check
      _
    $region3: #{tpu_custom_call.1} parent=1 // pred_check_branch
      %12 = sbr.rel (0) target = $region5
    $region4: #{tpu_custom_call.1} parent=1 // pred_region
      _
    $region5: #{tpu_custom_call.1} parent=1 // pred_fallthru
      _
    // Predicated region
    $region6: #{tpu_custom_call.1} parent=1 // pred_check
      _
    $region7: #{tpu_custom_call.1} parent=1 // pred_check_branch
      %14 = sbr.rel (0) target = $region9
    $region8: #{tpu_custom_call.1} parent=1 // pred_region
      _
    $region9: #{tpu_custom_call.1} parent=1 // pred_fallthru
      _
    // Predicated region
    $region10: #{tpu_custom_call.1} parent=1 // pred_check
      _
    $region11: #{tpu_custom_call.1} parent=1 // pred_check_branch
      %16 = sbr.rel (0) target = $region13
    $region12: #{tpu_custom_call.1} parent=1 // pred_region
      _
    $region13: #{tpu_custom_call.1} parent=1 // pred_fallthru
      _
    // Predicated region
    $region14: #{tpu_custom_call.1} parent=1 // pred_check
      _
    $region15: #{tpu_custom_call.1} parent=1 // pred_check_branch
      %18 = sbr.rel (0) target = $region17
    $region16: #{tpu_custom_call.1} parent=1 // pred_region
      _
    $region17: #{tpu_custom_call.1} parent=1 // pred_fallthru
      _
    // Predicated region
    $region18: #{tpu_custom_call.1} parent=1 // pred_check
      _
    $region19: #{tpu_custom_call.1} parent=1 // pred_check_branch
      %20 = sbr.rel (0) target = $region21
    $region20: #{tpu_custom_call.1} parent=1 // pred_region
      _
    $region21: #{tpu_custom_call.1} parent=1 // pred_fallthru
      _
    %v22 = vld [vmem:[%s0] sm:$0xff]
    %v23 = vld [vmem:[%s0 + $0x8] sm:$0xff]
    %v24 = vpack.c.bf16 %v23, %v22
    %v25 = vld [vmem:[%s1] sm:$0xf]
    %v26 = vld [vmem:[%s1 + $0x4] sm:$0xf]
    %v27 = vld [vmem:[%s1 + $0x8] sm:$0xf]
    %v28 = vld [vmem:[%s1 + $0xc] sm:$0xf]
    %v29 = vld [vmem:[%s2] sm:$0x1]
    %v31 = vlaneseq
    %v32 = vshrl.u32 %v31, 7
    %v33 = vsub.s32 0, %v32
    %v34 = vrot.slane %v29, %v33
    %v40 = vunpack.c.l.b16 %v25
    %v41 = vunpack.c.l.b16 %v26
    %v42 = vunpack.c.l.b16 %v27
    %v43 = vunpack.c.l.b16 %v28
    %v44 = vpack.c.b16 %v41, %v40
    %v45 = vpack.c.b16 %v43, %v42
    %vm48 = vcmask 261120
    %v50 = vsel %vm48, %v24, 0
    %52 = vmatprep.subr.bf16.mxu0 0
    %53 = vmatpush1.bf16.msra.mxu0 %v44
    %54 = vmatprep.subr.bf16.mxu0 0
    %55 = vmatpush1.bf16.msra.mxu0 %v45
    %56 = vmatprep.subr.bf16.mxu0 0
    %57 = vmatpush1.bf16.msra.mxu0 0
    %58 = vmatprep.subr.bf16.mxu0 0
    %59 = vmatpush1.bf16.msra.mxu0 0
    %60 = vmatprep.subr.bf16.mxu0 0
    %61 = vmatpush1.bf16.msra.mxu0 0
    %62 = vmatprep.subr.bf16.mxu0 0
    %63 = vmatpush1.bf16.msra.mxu0 0
    %64 = vmatprep.subr.bf16.mxu0 0
    %65 = vmatpush1.bf16.msra.mxu0 0
    %66 = vmatprep.subr.bf16.mxu0 0
    %67 = vmatpush1.bf16.msra.mxu0 0
    %68 = vmatprep.subr.bf16.mxu0 0
    %69 = vmatpush1.bf16.msra.mxu0 0
    %70 = vmatprep.subr.bf16.mxu0 0
    %71 = vmatpush1.bf16.msra.mxu0 0
    %72 = vmatprep.subr.bf16.mxu0 0
    %73 = vmatpush1.bf16.msra.mxu0 0
    %74 = vmatprep.subr.bf16.mxu0 0
    %75 = vmatpush1.bf16.msra.mxu0 0
    %76 = vmatprep.subr.bf16.mxu0 0
    %77 = vmatpush1.bf16.msra.mxu0 0
    %78 = vmatprep.subr.bf16.mxu0 0
    %79 = vmatpush1.bf16.msra.mxu0 0
    %80 = vmatprep.subr.bf16.mxu0 0
    %81 = vmatpush1.bf16.msra.mxu0 0
    %82 = vmatprep.subr.bf16.mxu0 0
    %83 = vmatpush1.bf16.msra.mxu0 0
    %84 = vmatprep.mubr.bf16.mxu0 0
    %85 = vmatmul.mubr.bf16.gmra.mrb[0].mxu0 %v50
    %v86 = vpop.f32.mrb[0].mxu0
    %v87 = vadd.f32 %v34, %v86
    %v88 = vpop.f32.mrb[0].mxu0
    %v89 = vpop.f32.mrb[0].mxu0
    %v90 = vadd.f32 %v34, %v89
    %v91 = vpop.f32.mrb[0].mxu0
    %92 = vdwg.mxu0
    %v93 = vmax.f32 %v87, 0.0
    %v94 = vmax.f32 %v90, 0.0
    %v95 = vpack.c.bf16 %v94, %v93
    %v96 = vld [vmem:[%s3] sm:$0xf]
    %v97 = vld [vmem:[%s3 + $0x4] sm:$0xf]
    %v98 = vld [vmem:[%s3 + $0x8] sm:$0xf]
    %v99 = vld [vmem:[%s3 + $0xc] sm:$0xf]
    %v100 = vld [vmem:[%s3 + $0x10] sm:$0xf]
    %v101 = vld [vmem:[%s3 + $0x14] sm:$0xf]
    %v102 = vld [vmem:[%s3 + $0x18] sm:$0xf]
    %v103 = vld [vmem:[%s3 + $0x1c] sm:$0xf]
    %v104 = vld [vmem:[%s4] sm:$0x1]
    %v106 = vlaneseq
    %v107 = vshrl.u32 %v106, 7
    %v108 = vsub.s32 0, %v107
    %v109 = vrot.slane %v104, %v108
    %v119 = vunpack.c.l.b16 %v96
    %v120 = vunpack.c.l.b16 %v97
    %v121 = vunpack.c.l.b16 %v98
    %v122 = vunpack.c.l.b16 %v99
    %v123 = vunpack.c.l.b16 %v100
    %v124 = vunpack.c.l.b16 %v101
    %v125 = vunpack.c.l.b16 %v102
    %v126 = vunpack.c.l.b16 %v103
    %v127 = vpack.c.b16 %v120, %v119
    %v128 = vpack.c.b16 %v122, %v121
    %v129 = vpack.c.b16 %v124, %v123
    %v130 = vpack.c.b16 %v126, %v125
    %vm135 = vcmask 523264
    %v137 = vsel %vm135, %v95, 0
    %139 = vmatprep.subr.bf16.mxu0 0
    %140 = vmatpush1.bf16.msra.mxu0 %v127
    %141 = vmatprep.subr.bf16.mxu0 0
    %142 = vmatpush1.bf16.msra.mxu0 %v128
    %143 = vmatprep.subr.bf16.mxu0 0
    %144 = vmatpush1.bf16.msra.mxu0 %v129
    %145 = vmatprep.subr.bf16.mxu0 0
    %146 = vmatpush1.bf16.msra.mxu0 %v130
    %147 = vmatprep.subr.bf16.mxu0 0
    %148 = vmatpush1.bf16.msra.mxu0 0
    %149 = vmatprep.subr.bf16.mxu0 0
    %150 = vmatpush1.bf16.msra.mxu0 0
    %151 = vmatprep.subr.bf16.mxu0 0
    %152 = vmatpush1.bf16.msra.mxu0 0
    %153 = vmatprep.subr.bf16.mxu0 0
    %154 = vmatpush1.bf16.msra.mxu0 0
    %155 = vmatprep.subr.bf16.mxu0 0
    %156 = vmatpush1.bf16.msra.mxu0 0
    %157 = vmatprep.subr.bf16.mxu0 0
    %158 = vmatpush1.bf16.msra.mxu0 0
    %159 = vmatprep.subr.bf16.mxu0 0
    %160 = vmatpush1.bf16.msra.mxu0 0
    %161 = vmatprep.subr.bf16.mxu0 0
    %162 = vmatpush1.bf16.msra.mxu0 0
    %163 = vmatprep.subr.bf16.mxu0 0
    %164 = vmatpush1.bf16.msra.mxu0 0
    %165 = vmatprep.subr.bf16.mxu0 0
    %166 = vmatpush1.bf16.msra.mxu0 0
    %167 = vmatprep.subr.bf16.mxu0 0
    %168 = vmatpush1.bf16.msra.mxu0 0
    %169 = vmatprep.subr.bf16.mxu0 0
    %170 = vmatpush1.bf16.msra.mxu0 0
    %171 = vmatprep.mubr.bf16.mxu0 0
    %172 = vmatmul.mubr.bf16.gmra.mrb[0].mxu0 %v137
    %v173 = vpop.f32.mrb[0].mxu0
    %v174 = vadd.f32 %v109, %v173
    %v175 = vpop.f32.mrb[0].mxu0
    %v176 = vpop.f32.mrb[0].mxu0
    %v177 = vadd.f32 %v109, %v176
    %v178 = vpop.f32.mrb[0].mxu0
    %179 = vdwg.mxu0
    %180 = vst.msk [vmem:[#allocation2] sm:$0xff] %vm48, %v174
    %181 = vst.msk [vmem:[#allocation2 + $0x8] sm:$0xff] %vm48, %v177
    // Predicated region
    $region22: #{tpu_custom_call.1} parent=1 // pred_check
      _
    $region23: #{tpu_custom_call.1} parent=1 // pred_check_branch
      %183 = sbr.rel (0) target = $region25
    $region24: #{tpu_custom_call.1} parent=1 // pred_region
      %s185 = ssub.s32 256, 256
      %186 = vsyncadd [#allocation3], %s185
      %s187 = sshll.u32 [#allocation2], 4
      %s188 = int_to_ptr.vmem [resolvable:$true] %s187
      %193 = dma.vmem_to_hbm [thread:$0]  %s188, 256, %s5, [#allocation3], 128, 128, 8
    $region25: #{tpu_custom_call.1} parent=1 // pred_fallthru
      _
    // Predicated region
    $region26: #{tpu_custom_call.1} parent=1 // pred_check
      _
    $region27: #{tpu_custom_call.1} parent=1 // pred_check_branch
      %195 = sbr.rel (0) target = $region29
    $region28: #{tpu_custom_call.1} parent=1 // pred_region
      %196 = dma.done [#allocation3], 256
    $region29: #{tpu_custom_call.1} parent=1 // pred_fallthru
      _
    %197 = vsyncpa [#allocation3], 1

</llo_original>
